<compile_context>
chip_gen: v7x
topology: tpu7x:2x2x1
jax: 0.10.0
libtpu: 0.0.40
codegen_flags: <defaults>
</compile_context>

<pallas_src>
import jax
import jax.numpy as jnp
from jax.experimental import pallas as pl
from jax.experimental.pallas import tpu as pltpu


def make_dqn_kernel(n_layers):
    """Kernel over one batch tile.  Refs: x, (w, b) * n_layers, out."""

    def kernel(*refs):
        x_ref = refs[0]
        out_ref = refs[-1]
        # x arrives as f32; cast to bf16 in-kernel (hidden under DMA/MXU).
        h = x_ref[...].astype(jnp.bfloat16)
        for li in range(n_layers):
            w_ref = refs[1 + 2 * li]
            b_ref = refs[2 + 2 * li]
            # MXU matmul with f32 accumulation; bias + ReLU on the VPU in f32.
            # (First layer has K = n_obs = 4 -> poorly packed MXU pass; bytes are
            #  trivial so we leave it on the MXU.)
            h = jnp.dot(h, w_ref[...], preferred_element_type=jnp.float32)
            h = h + b_ref[...]
            if li < n_layers - 1:
                h = jnp.maximum(h, 0.0).astype(jnp.bfloat16)  # bf16 feed to next MXU op
        out_ref[...] = h.astype(out_ref.dtype)  # bf16 writeback

    return kernel


def prepare_params(params):
    """One-time parameter preprocessing, hoisted out of the forward hot path.

    - weights -> bf16 (MXU-native rate, half the DMA bytes)
    - biases  -> f32 (1, out) (f32 accumulate / VPU path)
    - output head zero-padded to a lane-dense multiple of 128 columns
    Returns (flat_params, n_actions, out_pad)."""
    ws = [jnp.asarray(w) for w in params[0::2]]
    bs = [jnp.asarray(b).reshape(1, -1) for b in params[1::2]]
    n_actions = ws[-1].shape[1]
    out_pad = pl.cdiv(n_actions, 128) * 128
    ws[-1] = jnp.zeros((ws[-1].shape[0], out_pad), ws[-1].dtype).at[:, :n_actions].set(ws[-1])
    bs[-1] = jnp.zeros((1, out_pad), bs[-1].dtype).at[:, :n_actions].set(bs[-1])
    ws = [w.astype(jnp.bfloat16) for w in ws]
    bs = [b.astype(jnp.float32) for b in bs]
    flat = []
    for w, b in zip(ws, bs):
        flat += [w, b]
    return tuple(flat), n_actions, out_pad


def _num_tensorcores():
    """Best-effort TC-per-chip count; v5e/v6e = 1, v7x-style chips = 2."""
    try:
        kind = jax.devices()[0].device_kind.lower()
        return 2 if "v7" in kind else 1
    except Exception:
        return 1


def _choose_tb(batch, ncores):
    if ncores >= 2 and batch >= 256:
        tb = min(256, pl.cdiv(batch, ncores))  # one tile per TC, 256 matches MXU M-width
    else:
        tb = min(512, batch)                   # single grid step on 1-TC chips
    return max(8, pl.cdiv(tb, 8) * 8)


def dqn_forward(x, prepared, *, tb=None):
    """x: (B, n_obs) f32.  prepared: output of prepare_params()."""
    flat_params, n_actions, out_pad = prepared
    n_layers = len(flat_params) // 2
    B, n_obs = x.shape

    if tb is None:
        tb = _choose_tb(B, _num_tensorcores())

    b_pad = pl.cdiv(B, tb) * tb
    if b_pad != B:
        x = jnp.pad(x, ((0, b_pad - B), (0, 0)))
    grid = (b_pad // tb,)

    # x / out tiled over batch; weights & biases resident across the grid.
    in_specs = [pl.BlockSpec((tb, n_obs), lambda i: (i, 0))]
    for li in range(n_layers):
        w = flat_params[2 * li]
        b = flat_params[2 * li + 1]
        in_specs.append(pl.BlockSpec(w.shape, lambda i: (0, 0)))
        in_specs.append(pl.BlockSpec(b.shape, lambda i: (0, 0)))
    out_specs = pl.BlockSpec((tb, out_pad), lambda i: (i, 0))

    ws = flat_params[0::2]
    flops = 2 * b_pad * sum(w.shape[0] * w.shape[1] for w in ws)
    bytes_accessed = (
        x.size * x.dtype.itemsize
        + sum(p.size * p.dtype.itemsize for p in flat_params)
        + b_pad * out_pad * 2  # bf16 output
    )

    out = pl.pallas_call(
        make_dqn_kernel(n_layers),
        out_shape=jax.ShapeDtypeStruct((b_pad, out_pad), jnp.bfloat16),
        grid=grid,
        in_specs=in_specs,
        out_specs=out_specs,
        compiler_params=pltpu.CompilerParams(dimension_semantics=("parallel",)),
        cost_estimate=pl.CostEstimate(
            flops=flops, transcendentals=0, bytes_accessed=bytes_accessed
        ),
    )(x, *flat_params)

    return out[:B, :n_actions].astype(jnp.float32)


def init_params(key, n_observations, n_actions, n_hidden_layers=1, n_neurons=128):
    """Deterministic synthetic init (uniform, like PyTorch's default Linear init).

    Weights in (in_features, out_features) layout, biases as (1, out)."""
    dims = [(n_observations, n_neurons)]
    dims += [(n_neurons, n_neurons)] * n_hidden_layers
    dims += [(n_neurons, n_actions)]
    params = []
    for fan_in, fan_out in dims:
        key, kw, kb = jax.random.split(key, 3)
        bound = 1.0 / (fan_in ** 0.5)
        w = jax.random.uniform(kw, (fan_in, fan_out), jnp.float32, -bound, bound)
        b = jax.random.uniform(kb, (1, fan_out), jnp.float32, -bound, bound)
        params += [w, b]
    return tuple(params)


def dqn_reference(x, params):
    """Pure-JAX reference with the same bf16-operand / f32-accumulate numerics."""
    ws = params[0::2]
    bs = params[1::2]
    h = x.astype(jnp.bfloat16)
    for i, (w, b) in enumerate(zip(ws, bs)):
        h = jnp.dot(h, w.astype(jnp.bfloat16), preferred_element_type=jnp.float32) + b
        if i < len(ws) - 1:
            h = jnp.maximum(h, 0.0).astype(jnp.bfloat16)
    return h


if __name__ == "__main__":
    # CartPole-like DQN config: 4 observations, 2 actions, 128 hidden, 1 hidden layer.
    batch, n_obs, n_actions, n_neurons = 256, 4, 2, 128

    key = jax.random.PRNGKey(0)
    key, kx = jax.random.split(key)
    x = jax.random.normal(kx, (batch, n_obs), dtype=jnp.float32)
    params = init_params(key, n_obs, n_actions, n_hidden_layers=1, n_neurons=n_neurons)

    prepared = prepare_params(params)          # one-time: bf16 cast + head padding
    out = dqn_forward(x, prepared)
    out = jax.block_until_ready(out)

    ref = dqn_reference(x, params)
    assert out.shape == (batch, n_actions)
    assert jnp.allclose(out, ref, atol=2e-2, rtol=2e-2), "mismatch vs reference"

    print("KERNEL_OK")
</pallas_src>

<mosaic_0001>
module attributes {stable_mosaic.version = 11 : i64} {
  func.func @kernel(%arg0: i32, %arg1: memref<256x4xf32, #tpu.memory_space<vmem>>, %arg2: memref<4x128xbf16, #tpu.memory_space<vmem>>, %arg3: memref<1x128xf32, #tpu.memory_space<vmem>>, %arg4: memref<128x128xbf16, #tpu.memory_space<vmem>>, %arg5: memref<1x128xf32, #tpu.memory_space<vmem>>, %arg6: memref<128x128xbf16, #tpu.memory_space<vmem>>, %arg7: memref<1x128xf32, #tpu.memory_space<vmem>>, %arg8: memref<256x128xbf16, #tpu.memory_space<vmem>>) attributes {dimension_semantics = [#tpu.dimension_semantics<parallel>], iteration_bounds = array<i64: 1>, scalar_prefetch = 0 : i64, scratch_operands = 0 : i64, tpu.core_type = #tpu.core_type<tc>, window_params = [{transform_indices = @transform_0, window_bounds = array<i64: 256, 4>}, {pipeline_mode = #tpu.pipeline_mode<synchronous>, transform_indices = @transform_1, window_bounds = array<i64: 4, 128>}, {pipeline_mode = #tpu.pipeline_mode<synchronous>, transform_indices = @transform_2, window_bounds = array<i64: 1, 128>}, {pipeline_mode = #tpu.pipeline_mode<synchronous>, transform_indices = @transform_3, window_bounds = array<i64: 128, 128>}, {pipeline_mode = #tpu.pipeline_mode<synchronous>, transform_indices = @transform_4, window_bounds = array<i64: 1, 128>}, {pipeline_mode = #tpu.pipeline_mode<synchronous>, transform_indices = @transform_5, window_bounds = array<i64: 128, 128>}, {pipeline_mode = #tpu.pipeline_mode<synchronous>, transform_indices = @transform_6, window_bounds = array<i64: 1, 128>}, {transform_indices = @transform_7, window_bounds = array<i64: 256, 128>}]} {
    %c0 = arith.constant 0 : index
    %c0_0 = arith.constant 0 : index
    %0 = vector.load %arg1[%c0, %c0_0] : memref<256x4xf32, #tpu.memory_space<vmem>>, vector<256x4xf32>
    %1 = arith.truncf %0 : vector<256x4xf32> to vector<256x4xbf16>
    %c0_1 = arith.constant 0 : index
    %c0_2 = arith.constant 0 : index
    %2 = vector.load %arg2[%c0_1, %c0_2] : memref<4x128xbf16, #tpu.memory_space<vmem>>, vector<4x128xbf16>
    %cst = arith.constant dense<0.000000e+00> : vector<256x128xf32>
    %3 = tpu.matmul %1, %2, %cst {dimension_numbers = #tpu.dot_dimension_numbers<[1], [0], [0], [1], [0, 0, 1, 1], [], []>} : vector<256x4xbf16>, vector<4x128xbf16>, vector<256x128xf32> -> vector<256x128xf32>
    %c0_3 = arith.constant 0 : index
    %c0_4 = arith.constant 0 : index
    %4 = vector.load %arg3[%c0_3, %c0_4] : memref<1x128xf32, #tpu.memory_space<vmem>>, vector<1x128xf32>
    %5 = vector.broadcast %4 : vector<1x128xf32> to vector<256x128xf32>
    %6 = arith.addf %3, %5 : vector<256x128xf32>
    %cst_5 = arith.constant 0.000000e+00 : f32
    %7 = vector.broadcast %cst_5 : f32 to vector<256x128xf32>
    %8 = arith.maximumf %6, %7 : vector<256x128xf32>
    %9 = arith.truncf %8 : vector<256x128xf32> to vector<256x128xbf16>
    %c0_6 = arith.constant 0 : index
    %c0_7 = arith.constant 0 : index
    %10 = vector.load %arg4[%c0_6, %c0_7] : memref<128x128xbf16, #tpu.memory_space<vmem>>, vector<128x128xbf16>
    %cst_8 = arith.constant dense<0.000000e+00> : vector<256x128xf32>
    %11 = tpu.matmul %9, %10, %cst_8 {dimension_numbers = #tpu.dot_dimension_numbers<[1], [0], [0], [1], [0, 0, 1, 1], [], []>} : vector<256x128xbf16>, vector<128x128xbf16>, vector<256x128xf32> -> vector<256x128xf32>
    %c0_9 = arith.constant 0 : index
    %c0_10 = arith.constant 0 : index
    %12 = vector.load %arg5[%c0_9, %c0_10] : memref<1x128xf32, #tpu.memory_space<vmem>>, vector<1x128xf32>
    %13 = vector.broadcast %12 : vector<1x128xf32> to vector<256x128xf32>
    %14 = arith.addf %11, %13 : vector<256x128xf32>
    %cst_11 = arith.constant 0.000000e+00 : f32
    %15 = vector.broadcast %cst_11 : f32 to vector<256x128xf32>
    %16 = arith.maximumf %14, %15 : vector<256x128xf32>
    %17 = arith.truncf %16 : vector<256x128xf32> to vector<256x128xbf16>
    %c0_12 = arith.constant 0 : index
    %c0_13 = arith.constant 0 : index
    %18 = vector.load %arg6[%c0_12, %c0_13] : memref<128x128xbf16, #tpu.memory_space<vmem>>, vector<128x128xbf16>
    %cst_14 = arith.constant dense<0.000000e+00> : vector<256x128xf32>
    %19 = tpu.matmul %17, %18, %cst_14 {dimension_numbers = #tpu.dot_dimension_numbers<[1], [0], [0], [1], [0, 0, 1, 1], [], []>} : vector<256x128xbf16>, vector<128x128xbf16>, vector<256x128xf32> -> vector<256x128xf32>
    %c0_15 = arith.constant 0 : index
    %c0_16 = arith.constant 0 : index
    %20 = vector.load %arg7[%c0_15, %c0_16] : memref<1x128xf32, #tpu.memory_space<vmem>>, vector<1x128xf32>
    %21 = vector.broadcast %20 : vector<1x128xf32> to vector<256x128xf32>
    %22 = arith.addf %19, %21 : vector<256x128xf32>
    %23 = arith.truncf %22 : vector<256x128xf32> to vector<256x128xbf16>
    %c0_17 = arith.constant 0 : index
    %c0_18 = arith.constant 0 : index
    %24 = vector.load %arg8[%c0_17, %c0_18] : memref<256x128xbf16, #tpu.memory_space<vmem>>, vector<256x128xbf16>
    tpu.vector_store %arg8[%c0_17, %c0_18], %23 {strides = array<i32>} : memref<256x128xbf16, #tpu.memory_space<vmem>>, vector<256x128xbf16>,
    return
  }
  func.func @transform_0(%arg0: i32) -> (i32, i32) {
    %c0_i32 = arith.constant 0 : i32
    %c0_i32_0 = arith.constant 0 : i32
    return %arg0, %c0_i32 : i32, i32
  }
  func.func @transform_1(%arg0: i32) -> (i32, i32) {
    %c0_i32 = arith.constant 0 : i32
    %c0_i32_0 = arith.constant 0 : i32
    %c0_i32_1 = arith.constant 0 : i32
    return %c0_i32, %c0_i32_0 : i32, i32
  }
  func.func @transform_2(%arg0: i32) -> (i32, i32) {
    %c0_i32 = arith.constant 0 : i32
    %c0_i32_0 = arith.constant 0 : i32
    %c0_i32_1 = arith.constant 0 : i32
    return %c0_i32, %c0_i32_0 : i32, i32
  }
  func.func @transform_3(%arg0: i32) -> (i32, i32) {
    %c0_i32 = arith.constant 0 : i32
    %c0_i32_0 = arith.constant 0 : i32
    %c0_i32_1 = arith.constant 0 : i32
    return %c0_i32, %c0_i32_0 : i32, i32
  }
  func.func @transform_4(%arg0: i32) -> (i32, i32) {
    %c0_i32 = arith.constant 0 : i32
    %c0_i32_0 = arith.constant 0 : i32
    %c0_i32_1 = arith.constant 0 : i32
    return %c0_i32, %c0_i32_0 : i32, i32
  }
  func.func @transform_5(%arg0: i32) -> (i32, i32) {
    %c0_i32 = arith.constant 0 : i32
    %c0_i32_0 = arith.constant 0 : i32
    %c0_i32_1 = arith.constant 0 : i32
    return %c0_i32, %c0_i32_0 : i32, i32
  }
  func.func @transform_6(%arg0: i32) -> (i32, i32) {
    %c0_i32 = arith.constant 0 : i32
    %c0_i32_0 = arith.constant 0 : i32
    %c0_i32_1 = arith.constant 0 : i32
    return %c0_i32, %c0_i32_0 : i32, i32
  }
  func.func @transform_7(%arg0: i32) -> (i32, i32) {
    %c0_i32 = arith.constant 0 : i32
    %c0_i32_0 = arith.constant 0 : i32
    return %arg0, %c0_i32 : i32, i32
  }
}

</mosaic_0001>

<llo_original>
// kernel: tpu_custom_call.1
$region0: #{tpu_custom_call.1}
  #allocation0 [shape = 'u32[]', space=smem, size = 0x4, offset = 0x4, fixed_abs, tag = 'smem constant byte address 0x4 - core index']
  #allocation1 [shape = 'u32[144,128]{1,0:T(1,128)}', space=vmem, size = 0x12000, scoped, tag = 'internal scratch']
  %s0 = inlined_call_operand.vmem [shape: f32[256,4], index: 0, kind: input, shape index: {}]
  %s1 = inlined_call_operand.vmem [shape: bf16[4,128], index: 1, kind: input, shape index: {}]
  %s2 = inlined_call_operand.vmem [shape: f32[1,128], index: 2, kind: input, shape index: {}]
  %s3 = inlined_call_operand.vmem [shape: bf16[128,128], index: 3, kind: input, shape index: {}]
  %s4 = inlined_call_operand.vmem [shape: f32[1,128], index: 4, kind: input, shape index: {}]
  %s5 = inlined_call_operand.vmem [shape: bf16[128,128], index: 5, kind: input, shape index: {}]
  %s6 = inlined_call_operand.vmem [shape: f32[1,128], index: 6, kind: input, shape index: {}]
  %s7 = inlined_call_operand.hbm [shape: bf16[256,128], index: 7, kind: output, shape index: {}]
  %s8 = sld [smem:[#allocation0]]
  $region38: #{tpu_custom_call.1} parent=0
    _
  %s10 = ssub.s32 1, %s8
  %s11 = scalar_select 0, %s10, %s8
  $region1: #{tpu_custom_call.1} parent=0
    #allocation2 [shape = 'u8[65536]{0}', space=vmem, size = 0x10000, scoped, tag = 'output window, operand 0, single buffered']
    #allocation3 [shape = 's32[1]{0}', space=sflag, size = 0x4, scoped, tag = 'scoped memory for tpu_custom_call.1']
    %12 = vsyncpa [#allocation3], 0
    // Predicated region
    $region2: #{tpu_custom_call.1} parent=1 // pred_check
      _
    $region3: #{tpu_custom_call.1} parent=1 // pred_check_branch
      %14 = sbr.rel (0) target = $region5
    $region4: #{tpu_custom_call.1} parent=1 // pred_region
      _
    $region5: #{tpu_custom_call.1} parent=1 // pred_fallthru
      _
    // Predicated region
    $region6: #{tpu_custom_call.1} parent=1 // pred_check
      _
    $region7: #{tpu_custom_call.1} parent=1 // pred_check_branch
      %16 = sbr.rel (0) target = $region9
    $region8: #{tpu_custom_call.1} parent=1 // pred_region
      _
    $region9: #{tpu_custom_call.1} parent=1 // pred_fallthru
      _
    // Predicated region
    $region10: #{tpu_custom_call.1} parent=1 // pred_check
      _
    $region11: #{tpu_custom_call.1} parent=1 // pred_check_branch
      %18 = sbr.rel (0) target = $region13
    $region12: #{tpu_custom_call.1} parent=1 // pred_region
      _
    $region13: #{tpu_custom_call.1} parent=1 // pred_fallthru
      _
    // Predicated region
    $region14: #{tpu_custom_call.1} parent=1 // pred_check
      _
    $region15: #{tpu_custom_call.1} parent=1 // pred_check_branch
      %20 = sbr.rel (0) target = $region17
    $region16: #{tpu_custom_call.1} parent=1 // pred_region
      _
    $region17: #{tpu_custom_call.1} parent=1 // pred_fallthru
      _
    // Predicated region
    $region18: #{tpu_custom_call.1} parent=1 // pred_check
      _
    $region19: #{tpu_custom_call.1} parent=1 // pred_check_branch
      %22 = sbr.rel (0) target = $region21
    $region20: #{tpu_custom_call.1} parent=1 // pred_region
      _
    $region21: #{tpu_custom_call.1} parent=1 // pred_fallthru
      _
    // Predicated region
    $region22: #{tpu_custom_call.1} parent=1 // pred_check
      _
    $region23: #{tpu_custom_call.1} parent=1 // pred_check_branch
      %24 = sbr.rel (0) target = $region25
    $region24: #{tpu_custom_call.1} parent=1 // pred_region
      _
    $region25: #{tpu_custom_call.1} parent=1 // pred_fallthru
      _
    // Predicated region
    $region26: #{tpu_custom_call.1} parent=1 // pred_check
      _
    $region27: #{tpu_custom_call.1} parent=1 // pred_check_branch
      %26 = sbr.rel (0) target = $region29
    $region28: #{tpu_custom_call.1} parent=1 // pred_region
      _
    $region29: #{tpu_custom_call.1} parent=1 // pred_fallthru
      _
    %v28 = vld [vmem:[%s0] sm:$0xff]
    %v29 = vld [vmem:[%s0 + $0x8] sm:$0xff]
    %v30 = vld [vmem:[%s0 + $0x10] sm:$0xff]
    %v31 = vld [vmem:[%s0 + $0x18] sm:$0xff]
    %v32 = vld [vmem:[%s0 + $0x20] sm:$0xff]
    %v33 = vld [vmem:[%s0 + $0x28] sm:$0xff]
    %v34 = vld [vmem:[%s0 + $0x30] sm:$0xff]
    %v35 = vld [vmem:[%s0 + $0x38] sm:$0xff]
    %v36 = vld [vmem:[%s0 + $0x40] sm:$0xff]
    %v37 = vld [vmem:[%s0 + $0x48] sm:$0xff]
    %v38 = vld [vmem:[%s0 + $0x50] sm:$0xff]
    %v39 = vld [vmem:[%s0 + $0x58] sm:$0xff]
    %v40 = vld [vmem:[%s0 + $0x60] sm:$0xff]
    %v41 = vld [vmem:[%s0 + $0x68] sm:$0xff]
    %v42 = vld [vmem:[%s0 + $0x70] sm:$0xff]
    %v43 = vld [vmem:[%s0 + $0x78] sm:$0xff]
    %v44 = vld [vmem:[%s0 + $0x80] sm:$0xff]
    %v45 = vld [vmem:[%s0 + $0x88] sm:$0xff]
    %v46 = vld [vmem:[%s0 + $0x90] sm:$0xff]
    %v47 = vld [vmem:[%s0 + $0x98] sm:$0xff]
    %v48 = vld [vmem:[%s0 + $0xa0] sm:$0xff]
    %v49 = vld [vmem:[%s0 + $0xa8] sm:$0xff]
    %v50 = vld [vmem:[%s0 + $0xb0] sm:$0xff]
    %v51 = vld [vmem:[%s0 + $0xb8] sm:$0xff]
    %v52 = vld [vmem:[%s0 + $0xc0] sm:$0xff]
    %v53 = vld [vmem:[%s0 + $0xc8] sm:$0xff]
    %v54 = vld [vmem:[%s0 + $0xd0] sm:$0xff]
    %v55 = vld [vmem:[%s0 + $0xd8] sm:$0xff]
    %v56 = vld [vmem:[%s0 + $0xe0] sm:$0xff]
    %v57 = vld [vmem:[%s0 + $0xe8] sm:$0xff]
    %v58 = vld [vmem:[%s0 + $0xf0] sm:$0xff]
    %v59 = vld [vmem:[%s0 + $0xf8] sm:$0xff]
    %v60 = vpack.c.bf16 %v29, %v28
    %v61 = vpack.c.bf16 %v31, %v30
    %v62 = vpack.c.bf16 %v33, %v32
    %v63 = vpack.c.bf16 %v35, %v34
    %v64 = vpack.c.bf16 %v37, %v36
    %v65 = vpack.c.bf16 %v39, %v38
    %v66 = vpack.c.bf16 %v41, %v40
    %v67 = vpack.c.bf16 %v43, %v42
    %v68 = vpack.c.bf16 %v45, %v44
    %v69 = vpack.c.bf16 %v47, %v46
    %v70 = vpack.c.bf16 %v49, %v48
    %v71 = vpack.c.bf16 %v51, %v50
    %v72 = vpack.c.bf16 %v53, %v52
    %v73 = vpack.c.bf16 %v55, %v54
    %v74 = vpack.c.bf16 %v57, %v56
    %v75 = vpack.c.bf16 %v59, %v58
    %v76 = vld [vmem:[%s1] sm:$0x3]
    %v77 = vld [vmem:[%s2] sm:$0x1]
    %v79 = vlaneseq
    %v80 = vshrl.u32 %v79, 7
    %v81 = vsub.s32 0, %v80
    %v82 = vrot.slane %v77, %v81
    %vm84 = vcmask 31744
    %v86 = vsel %vm84, %v60, 0
    %v89 = vsel %vm84, %v61, 0
    %v92 = vsel %vm84, %v62, 0
    %v95 = vsel %vm84, %v63, 0
    %v98 = vsel %vm84, %v64, 0
    %v101 = vsel %vm84, %v65, 0
    %v104 = vsel %vm84, %v66, 0
    %v107 = vsel %vm84, %v67, 0
    %v110 = vsel %vm84, %v68, 0
    %v113 = vsel %vm84, %v69, 0
    %v116 = vsel %vm84, %v70, 0
    %v119 = vsel %vm84, %v71, 0
    %v122 = vsel %vm84, %v72, 0
    %v125 = vsel %vm84, %v73, 0
    %v128 = vsel %vm84, %v74, 0
    %v131 = vsel %vm84, %v75, 0
    %vm133 = vcmask 1041408
    %v135 = vsel %vm133, %v76, 0
    %137 = vmatprep.subr.bf16.mxu0 0
    %138 = vmatpush1.bf16.msra.mxu0 %v135
    %139 = vmatprep.subr.bf16.mxu0 0
    %140 = vmatpush1.bf16.msra.mxu0 0
    %141 = vmatprep.subr.bf16.mxu0 0
    %142 = vmatpush1.bf16.msra.mxu0 0
    %143 = vmatprep.subr.bf16.mxu0 0
    %144 = vmatpush1.bf16.msra.mxu0 0
    %145 = vmatprep.subr.bf16.mxu0 0
    %146 = vmatpush1.bf16.msra.mxu0 0
    %147 = vmatprep.subr.bf16.mxu0 0
    %148 = vmatpush1.bf16.msra.mxu0 0
    %149 = vmatprep.subr.bf16.mxu0 0
    %150 = vmatpush1.bf16.msra.mxu0 0
    %151 = vmatprep.subr.bf16.mxu0 0
    %152 = vmatpush1.bf16.msra.mxu0 0
    %153 = vmatprep.subr.bf16.mxu0 0
    %154 = vmatpush1.bf16.msra.mxu0 0
    %155 = vmatprep.subr.bf16.mxu0 0
    %156 = vmatpush1.bf16.msra.mxu0 0
    %157 = vmatprep.subr.bf16.mxu0 0
    %158 = vmatpush1.bf16.msra.mxu0 0
    %159 = vmatprep.subr.bf16.mxu0 0
    %160 = vmatpush1.bf16.msra.mxu0 0
    %161 = vmatprep.subr.bf16.mxu0 0
    %162 = vmatpush1.bf16.msra.mxu0 0
    %163 = vmatprep.subr.bf16.mxu0 0
    %164 = vmatpush1.bf16.msra.mxu0 0
    %165 = vmatprep.subr.bf16.mxu0 0
    %166 = vmatpush1.bf16.msra.mxu0 0
    %167 = vmatprep.subr.bf16.mxu0 0
    %168 = vmatpush1.bf16.msra.mxu0 0
    %169 = vmatprep.mubr.bf16.mxu0 0
    %170 = vmatmul.mubr.bf16.gmra.mrb[0].mxu0 %v86
    %v171 = vpop.f32.mrb[0].mxu0
    %v172 = vadd.f32 %v82, %v171
    %v173 = vpop.f32.mrb[0].mxu0
    %v174 = vpop.f32.mrb[0].mxu0
    %v175 = vadd.f32 %v82, %v174
    %v176 = vpop.f32.mrb[0].mxu0
    %177 = vmatprep.mubr.bf16.mxu0 0
    %178 = vmatmul.mubr.bf16.gmra.mrb[0].mxu0 %v89
    %v179 = vpop.f32.mrb[0].mxu0
    %v180 = vadd.f32 %v82, %v179
    %v181 = vpop.f32.mrb[0].mxu0
    %v182 = vpop.f32.mrb[0].mxu0
    %v183 = vadd.f32 %v82, %v182
    %v184 = vpop.f32.mrb[0].mxu0
    %185 = vmatprep.mubr.bf16.mxu0 0
    %186 = vmatmul.mubr.bf16.gmra.mrb[0].mxu0 %v92
    %v187 = vpop.f32.mrb[0].mxu0
    %v188 = vadd.f32 %v82, %v187
    %v189 = vpop.f32.mrb[0].mxu0
    %v190 = vpop.f32.mrb[0].mxu0
    %v191 = vadd.f32 %v82, %v190
    %v192 = vpop.f32.mrb[0].mxu0
    %193 = vmatprep.mubr.bf16.mxu0 0
    %194 = vmatmul.mubr.bf16.gmra.mrb[0].mxu0 %v95
    %v195 = vpop.f32.mrb[0].mxu0
    %v196 = vadd.f32 %v82, %v195
    %v197 = vpop.f32.mrb[0].mxu0
    %v198 = vpop.f32.mrb[0].mxu0
    %v199 = vadd.f32 %v82, %v198
    %v200 = vpop.f32.mrb[0].mxu0
    %201 = vmatprep.mubr.bf16.mxu0 0
    %202 = vmatmul.mubr.bf16.gmra.mrb[0].mxu0 %v98
    %v203 = vpop.f32.mrb[0].mxu0
    %v204 = vadd.f32 %v82, %v203
    %v205 = vpop.f32.mrb[0].mxu0
    %v206 = vpop.f32.mrb[0].mxu0
    %v207 = vadd.f32 %v82, %v206
    %v208 = vpop.f32.mrb[0].mxu0
    %209 = vmatprep.mubr.bf16.mxu0 0
    %210 = vmatmul.mubr.bf16.gmra.mrb[0].mxu0 %v101
    %v211 = vpop.f32.mrb[0].mxu0
    %v212 = vadd.f32 %v82, %v211
    %v213 = vpop.f32.mrb[0].mxu0
    %v214 = vpop.f32.mrb[0].mxu0
    %v215 = vadd.f32 %v82, %v214
    %v216 = vpop.f32.mrb[0].mxu0
    %217 = vmatprep.mubr.bf16.mxu0 0
    %218 = vmatmul.mubr.bf16.gmra.mrb[0].mxu0 %v104
    %v219 = vpop.f32.mrb[0].mxu0
    %v220 = vadd.f32 %v82, %v219
    %v221 = vpop.f32.mrb[0].mxu0
    %v222 = vpop.f32.mrb[0].mxu0
    %v223 = vadd.f32 %v82, %v222
    %v224 = vpop.f32.mrb[0].mxu0
    %225 = vmatprep.mubr.bf16.mxu0 0
    %226 = vmatmul.mubr.bf16.gmra.mrb[0].mxu0 %v107
    %v227 = vpop.f32.mrb[0].mxu0
    %v228 = vadd.f32 %v82, %v227
    %v229 = vpop.f32.mrb[0].mxu0
    %v230 = vpop.f32.mrb[0].mxu0
    %v231 = vadd.f32 %v82, %v230
    %v232 = vpop.f32.mrb[0].mxu0
    %233 = vmatprep.mubr.bf16.mxu0 0
    %234 = vmatmul.mubr.bf16.gmra.mrb[0].mxu0 %v110
    %v235 = vpop.f32.mrb[0].mxu0
    %v236 = vadd.f32 %v82, %v235
    %v237 = vpop.f32.mrb[0].mxu0
    %v238 = vpop.f32.mrb[0].mxu0
    %v239 = vadd.f32 %v82, %v238
    %v240 = vpop.f32.mrb[0].mxu0
    %241 = vmatprep.mubr.bf16.mxu0 0
    %242 = vmatmul.mubr.bf16.gmra.mrb[0].mxu0 %v113
    %v243 = vpop.f32.mrb[0].mxu0
    %v244 = vadd.f32 %v82, %v243
    %v245 = vpop.f32.mrb[0].mxu0
    %v246 = vpop.f32.mrb[0].mxu0
    %v247 = vadd.f32 %v82, %v246
    %v248 = vpop.f32.mrb[0].mxu0
    %249 = vmatprep.mubr.bf16.mxu0 0
    %250 = vmatmul.mubr.bf16.gmra.mrb[0].mxu0 %v116
    %v251 = vpop.f32.mrb[0].mxu0
    %v252 = vadd.f32 %v82, %v251
    %v253 = vpop.f32.mrb[0].mxu0
    %v254 = vpop.f32.mrb[0].mxu0
    %v255 = vadd.f32 %v82, %v254
    %v256 = vpop.f32.mrb[0].mxu0
    %257 = vmatprep.mubr.bf16.mxu0 0
    %258 = vmatmul.mubr.bf16.gmra.mrb[0].mxu0 %v119
    %v259 = vpop.f32.mrb[0].mxu0
    %v260 = vadd.f32 %v82, %v259
    %v261 = vpop.f32.mrb[0].mxu0
    %v262 = vpop.f32.mrb[0].mxu0
    %v263 = vadd.f32 %v82, %v262
    %v264 = vpop.f32.mrb[0].mxu0
    %265 = vmatprep.mubr.bf16.mxu0 0
    %266 = vmatmul.mubr.bf16.gmra.mrb[0].mxu0 %v122
    %v267 = vpop.f32.mrb[0].mxu0
    %v268 = vadd.f32 %v82, %v267
    %v269 = vpop.f32.mrb[0].mxu0
    %v270 = vpop.f32.mrb[0].mxu0
    %v271 = vadd.f32 %v82, %v270
    %v272 = vpop.f32.mrb[0].mxu0
    %273 = vmatprep.mubr.bf16.mxu0 0
    %274 = vmatmul.mubr.bf16.gmra.mrb[0].mxu0 %v125
    %v275 = vpop.f32.mrb[0].mxu0
    %v276 = vadd.f32 %v82, %v275
    %v277 = vpop.f32.mrb[0].mxu0
    %v278 = vpop.f32.mrb[0].mxu0
    %v279 = vadd.f32 %v82, %v278
    %v280 = vpop.f32.mrb[0].mxu0
    %281 = vmatprep.mubr.bf16.mxu0 0
    %282 = vmatmul.mubr.bf16.gmra.mrb[0].mxu0 %v128
    %v283 = vpop.f32.mrb[0].mxu0
    %v284 = vadd.f32 %v82, %v283
    %v285 = vpop.f32.mrb[0].mxu0
    %v286 = vpop.f32.mrb[0].mxu0
    %v287 = vadd.f32 %v82, %v286
    %v288 = vpop.f32.mrb[0].mxu0
    %289 = vmatprep.mubr.bf16.mxu0 0
    %290 = vmatmul.mubr.bf16.gmra.mrb[0].mxu0 %v131
    %v291 = vpop.f32.mrb[0].mxu0
    %v292 = vadd.f32 %v82, %v291
    %v293 = vpop.f32.mrb[0].mxu0
    %v294 = vpop.f32.mrb[0].mxu0
    %v295 = vadd.f32 %v82, %v294
    %v296 = vpop.f32.mrb[0].mxu0
    %297 = vdwg.mxu0
    %v298 = vmax.f32 %v172, 0.0
    %v299 = vmax.f32 %v175, 0.0
    %v300 = vmax.f32 %v180, 0.0
    %v301 = vmax.f32 %v183, 0.0
    %v302 = vmax.f32 %v188, 0.0
    %v303 = vmax.f32 %v191, 0.0
    %v304 = vmax.f32 %v196, 0.0
    %v305 = vmax.f32 %v199, 0.0
    %v306 = vmax.f32 %v204, 0.0
    %v307 = vmax.f32 %v207, 0.0
    %v308 = vmax.f32 %v212, 0.0
    %v309 = vmax.f32 %v215, 0.0
    %v310 = vmax.f32 %v220, 0.0
    %v311 = vmax.f32 %v223, 0.0
    %v312 = vmax.f32 %v228, 0.0
    %v313 = vmax.f32 %v231, 0.0
    %v314 = vmax.f32 %v236, 0.0
    %v315 = vmax.f32 %v239, 0.0
    %v316 = vmax.f32 %v244, 0.0
    %v317 = vmax.f32 %v247, 0.0
    %v318 = vmax.f32 %v252, 0.0
    %v319 = vmax.f32 %v255, 0.0
    %v320 = vmax.f32 %v260, 0.0
    %v321 = vmax.f32 %v263, 0.0
    %v322 = vmax.f32 %v268, 0.0
    %v323 = vmax.f32 %v271, 0.0
    %v324 = vmax.f32 %v276, 0.0
    %v325 = vmax.f32 %v279, 0.0
    %v326 = vmax.f32 %v284, 0.0
    %v327 = vmax.f32 %v287, 0.0
    %v328 = vmax.f32 %v292, 0.0
    %v329 = vmax.f32 %v295, 0.0
    %v330 = vpack.c.bf16 %v299, %v298
    %v331 = vpack.c.bf16 %v301, %v300
    %v332 = vpack.c.bf16 %v303, %v302
    %v333 = vpack.c.bf16 %v305, %v304
    %v334 = vpack.c.bf16 %v307, %v306
    %v335 = vpack.c.bf16 %v309, %v308
    %v336 = vpack.c.bf16 %v311, %v310
    %v337 = vpack.c.bf16 %v313, %v312
    %v338 = vpack.c.bf16 %v315, %v314
    %v339 = vpack.c.bf16 %v317, %v316
    %v340 = vpack.c.bf16 %v319, %v318
    %v341 = vpack.c.bf16 %v321, %v320
    %v342 = vpack.c.bf16 %v323, %v322
    %v343 = vpack.c.bf16 %v325, %v324
    %v344 = vpack.c.bf16 %v327, %v326
    %v345 = vpack.c.bf16 %v329, %v328
    %v346 = vld [vmem:[%s3] sm:$0xf]
    %v347 = vld [vmem:[%s3 + $0x4] sm:$0xf]
    %v348 = vld [vmem:[%s3 + $0x8] sm:$0xf]
    %v349 = vld [vmem:[%s3 + $0xc] sm:$0xf]
    %v350 = vld [vmem:[%s3 + $0x10] sm:$0xf]
    %v351 = vld [vmem:[%s3 + $0x14] sm:$0xf]
    %v352 = vld [vmem:[%s3 + $0x18] sm:$0xf]
    %v353 = vld [vmem:[%s3 + $0x1c] sm:$0xf]
    %v354 = vld [vmem:[%s3 + $0x20] sm:$0xf]
    %v355 = vld [vmem:[%s3 + $0x24] sm:$0xf]
    %v356 = vld [vmem:[%s3 + $0x28] sm:$0xf]
    %v357 = vld [vmem:[%s3 + $0x2c] sm:$0xf]
    %v358 = vld [vmem:[%s3 + $0x30] sm:$0xf]
    %v359 = vld [vmem:[%s3 + $0x34] sm:$0xf]
    %v360 = vld [vmem:[%s3 + $0x38] sm:$0xf]
    %v361 = vld [vmem:[%s3 + $0x3c] sm:$0xf]
    %v362 = vld [vmem:[%s4] sm:$0x1]
    %v364 = vlaneseq
    %v365 = vshrl.u32 %v364, 7
    %v366 = vsub.s32 0, %v365
    %v367 = vrot.slane %v362, %v366
    %v385 = vunpack.c.l.b16 %v346
    %v386 = vunpack.c.l.b16 %v347
    %v387 = vunpack.c.l.b16 %v348
    %v388 = vunpack.c.l.b16 %v349
    %v389 = vunpack.c.l.b16 %v350
    %v390 = vunpack.c.l.b16 %v351
    %v391 = vunpack.c.l.b16 %v352
    %v392 = vunpack.c.l.b16 %v353
    %v393 = vunpack.c.l.b16 %v354
    %v394 = vunpack.c.l.b16 %v355
    %v395 = vunpack.c.l.b16 %v356
    %v396 = vunpack.c.l.b16 %v357
    %v397 = vunpack.c.l.b16 %v358
    %v398 = vunpack.c.l.b16 %v359
    %v399 = vunpack.c.l.b16 %v360
    %v400 = vunpack.c.l.b16 %v361
    %v401 = vpack.c.b16 %v386, %v385
    %v402 = vpack.c.b16 %v388, %v387
    %v403 = vpack.c.b16 %v390, %v389
    %v404 = vpack.c.b16 %v392, %v391
    %v405 = vpack.c.b16 %v394, %v393
    %v406 = vpack.c.b16 %v396, %v395
    %v407 = vpack.c.b16 %v398, %v397
    %v408 = vpack.c.b16 %v400, %v399
    %417 = vmatprep.subr.bf16.mxu0 0
    %418 = vmatpush1.bf16.msra.mxu0 %v401
    %419 = vmatprep.subr.bf16.mxu0 0
    %420 = vmatpush1.bf16.msra.mxu0 %v402
    %421 = vmatprep.subr.bf16.mxu0 0
    %422 = vmatpush1.bf16.msra.mxu0 %v403
    %423 = vmatprep.subr.bf16.mxu0 0
    %424 = vmatpush1.bf16.msra.mxu0 %v404
    %425 = vmatprep.subr.bf16.mxu0 0
    %426 = vmatpush1.bf16.msra.mxu0 %v405
    %427 = vmatprep.subr.bf16.mxu0 0
    %428 = vmatpush1.bf16.msra.mxu0 %v406
    %429 = vmatprep.subr.bf16.mxu0 0
    %430 = vmatpush1.bf16.msra.mxu0 %v407
    %431 = vmatprep.subr.bf16.mxu0 0
    %432 = vmatpush1.bf16.msra.mxu0 %v408
    %433 = vmatprep.subr.bf16.mxu0 0
    %434 = vmatpush1.bf16.msra.mxu0 0
    %435 = vmatprep.subr.bf16.mxu0 0
    %436 = vmatpush1.bf16.msra.mxu0 0
    %437 = vmatprep.subr.bf16.mxu0 0
    %438 = vmatpush1.bf16.msra.mxu0 0
    %439 = vmatprep.subr.bf16.mxu0 0
    %440 = vmatpush1.bf16.msra.mxu0 0
    %441 = vmatprep.subr.bf16.mxu0 0
    %442 = vmatpush1.bf16.msra.mxu0 0
    %443 = vmatprep.subr.bf16.mxu0 0
    %444 = vmatpush1.bf16.msra.mxu0 0
    %445 = vmatprep.subr.bf16.mxu0 0
    %446 = vmatpush1.bf16.msra.mxu0 0
    %447 = vmatprep.subr.bf16.mxu0 0
    %448 = vmatpush1.bf16.msra.mxu0 0
    %449 = vmatprep.mubr.bf16.mxu0 0
    %450 = vmatmul.mubr.bf16.gmra.mrb[0].mxu0 %v330
    %v451 = vpop.f32.mrb[0].mxu0
    %v452 = vadd.f32 %v367, %v451
    %v453 = vpop.f32.mrb[0].mxu0
    %v454 = vpop.f32.mrb[0].mxu0
    %v455 = vadd.f32 %v367, %v454
    %v456 = vpop.f32.mrb[0].mxu0
    %457 = vmatprep.mubr.bf16.mxu0 0
    %458 = vmatmul.mubr.bf16.gmra.mrb[0].mxu0 %v331
    %v459 = vpop.f32.mrb[0].mxu0
    %v460 = vadd.f32 %v367, %v459
    %v461 = vpop.f32.mrb[0].mxu0
    %v462 = vpop.f32.mrb[0].mxu0
    %v463 = vadd.f32 %v367, %v462
    %v464 = vpop.f32.mrb[0].mxu0
    %465 = vmatprep.mubr.bf16.mxu0 0
    %466 = vmatmul.mubr.bf16.gmra.mrb[0].mxu0 %v332
    %v467 = vpop.f32.mrb[0].mxu0
    %v468 = vadd.f32 %v367, %v467
    %v469 = vpop.f32.mrb[0].mxu0
    %v470 = vpop.f32.mrb[0].mxu0
    %v471 = vadd.f32 %v367, %v470
    %v472 = vpop.f32.mrb[0].mxu0
    %473 = vmatprep.mubr.bf16.mxu0 0
    %474 = vmatmul.mubr.bf16.gmra.mrb[0].mxu0 %v333
    %v475 = vpop.f32.mrb[0].mxu0
    %v476 = vadd.f32 %v367, %v475
    %v477 = vpop.f32.mrb[0].mxu0
    %v478 = vpop.f32.mrb[0].mxu0
    %v479 = vadd.f32 %v367, %v478
    %v480 = vpop.f32.mrb[0].mxu0
    %481 = vmatprep.mubr.bf16.mxu0 0
    %482 = vmatmul.mubr.bf16.gmra.mrb[0].mxu0 %v334
    %v483 = vpop.f32.mrb[0].mxu0
    %v484 = vadd.f32 %v367, %v483
    %v485 = vpop.f32.mrb[0].mxu0
    %v486 = vpop.f32.mrb[0].mxu0
    %v487 = vadd.f32 %v367, %v486
    %v488 = vpop.f32.mrb[0].mxu0
    %489 = vmatprep.mubr.bf16.mxu0 0
    %490 = vmatmul.mubr.bf16.gmra.mrb[0].mxu0 %v335
    %v491 = vpop.f32.mrb[0].mxu0
    %v492 = vadd.f32 %v367, %v491
    %v493 = vpop.f32.mrb[0].mxu0
    %v494 = vpop.f32.mrb[0].mxu0
    %v495 = vadd.f32 %v367, %v494
    %v496 = vpop.f32.mrb[0].mxu0
    %497 = vmatprep.mubr.bf16.mxu0 0
    %498 = vmatmul.mubr.bf16.gmra.mrb[0].mxu0 %v336
    %v499 = vpop.f32.mrb[0].mxu0
    %v500 = vadd.f32 %v367, %v499
    %v501 = vpop.f32.mrb[0].mxu0
    %v502 = vpop.f32.mrb[0].mxu0
    %v503 = vadd.f32 %v367, %v502
    %v504 = vpop.f32.mrb[0].mxu0
    %505 = vmatprep.mubr.bf16.mxu0 0
    %506 = vmatmul.mubr.bf16.gmra.mrb[0].mxu0 %v337
    %v507 = vpop.f32.mrb[0].mxu0
    %v508 = vadd.f32 %v367, %v507
    %v509 = vpop.f32.mrb[0].mxu0
    %v510 = vpop.f32.mrb[0].mxu0
    %v511 = vadd.f32 %v367, %v510
    %v512 = vpop.f32.mrb[0].mxu0
    %513 = vmatprep.mubr.bf16.mxu0 0
    %514 = vmatmul.mubr.bf16.gmra.mrb[0].mxu0 %v338
    %v515 = vpop.f32.mrb[0].mxu0
    %v516 = vadd.f32 %v367, %v515
    %v517 = vpop.f32.mrb[0].mxu0
    %v518 = vpop.f32.mrb[0].mxu0
    %v519 = vadd.f32 %v367, %v518
    %v520 = vpop.f32.mrb[0].mxu0
    %521 = vmatprep.mubr.bf16.mxu0 0
    %522 = vmatmul.mubr.bf16.gmra.mrb[0].mxu0 %v339
    %v523 = vpop.f32.mrb[0].mxu0
    %v524 = vadd.f32 %v367, %v523
    %v525 = vpop.f32.mrb[0].mxu0
    %v526 = vpop.f32.mrb[0].mxu0
    %v527 = vadd.f32 %v367, %v526
    %v528 = vpop.f32.mrb[0].mxu0
    %529 = vmatprep.mubr.bf16.mxu0 0
    %530 = vmatmul.mubr.bf16.gmra.mrb[0].mxu0 %v340
    %v531 = vpop.f32.mrb[0].mxu0
    %v532 = vadd.f32 %v367, %v531
    %v533 = vpop.f32.mrb[0].mxu0
    %v534 = vpop.f32.mrb[0].mxu0
    %v535 = vadd.f32 %v367, %v534
    %v536 = vpop.f32.mrb[0].mxu0
    %537 = vmatprep.mubr.bf16.mxu0 0
    %538 = vmatmul.mubr.bf16.gmra.mrb[0].mxu0 %v341
    %v539 = vpop.f32.mrb[0].mxu0
    %v540 = vadd.f32 %v367, %v539
    %v541 = vpop.f32.mrb[0].mxu0
    %v542 = vpop.f32.mrb[0].mxu0
    %v543 = vadd.f32 %v367, %v542
    %v544 = vpop.f32.mrb[0].mxu0
    %545 = vmatprep.mubr.bf16.mxu0 0
    %546 = vmatmul.mubr.bf16.gmra.mrb[0].mxu0 %v342
    %v547 = vpop.f32.mrb[0].mxu0
    %v548 = vadd.f32 %v367, %v547
    %v549 = vpop.f32.mrb[0].mxu0
    %v550 = vpop.f32.mrb[0].mxu0
    %v551 = vadd.f32 %v367, %v550
    %v552 = vpop.f32.mrb[0].mxu0
    %553 = vmatprep.mubr.bf16.mxu0 0
    %554 = vmatmul.mubr.bf16.gmra.mrb[0].mxu0 %v343
    %v555 = vpop.f32.mrb[0].mxu0
    %v556 = vadd.f32 %v367, %v555
    %v557 = vpop.f32.mrb[0].mxu0
    %v558 = vpop.f32.mrb[0].mxu0
    %v559 = vadd.f32 %v367, %v558
    %v560 = vpop.f32.mrb[0].mxu0
    %561 = vmatprep.mubr.bf16.mxu0 0
    %562 = vmatmul.mubr.bf16.gmra.mrb[0].mxu0 %v344
    %v563 = vpop.f32.mrb[0].mxu0
    %v564 = vadd.f32 %v367, %v563
    %v565 = vpop.f32.mrb[0].mxu0
    %v566 = vpop.f32.mrb[0].mxu0
    %v567 = vadd.f32 %v367, %v566
    %v568 = vpop.f32.mrb[0].mxu0
    %569 = vmatprep.mubr.bf16.mxu0 0
    %570 = vmatmul.mubr.bf16.gmra.mrb[0].mxu0 %v345
    %v571 = vpop.f32.mrb[0].mxu0
    %v572 = vadd.f32 %v367, %v571
    %v573 = vpop.f32.mrb[0].mxu0
    %v574 = vpop.f32.mrb[0].mxu0
    %v575 = vadd.f32 %v367, %v574
    %v576 = vpop.f32.mrb[0].mxu0
    %577 = vdwg.mxu0
    %v578 = vmax.f32 %v452, 0.0
    %v579 = vmax.f32 %v455, 0.0
    %v580 = vmax.f32 %v460, 0.0
    %v581 = vmax.f32 %v463, 0.0
    %v582 = vmax.f32 %v468, 0.0
    %v583 = vmax.f32 %v471, 0.0
    %v584 = vmax.f32 %v476, 0.0
    %v585 = vmax.f32 %v479, 0.0
    %v586 = vmax.f32 %v484, 0.0
    %v587 = vmax.f32 %v487, 0.0
    %v588 = vmax.f32 %v492, 0.0
    %v589 = vmax.f32 %v495, 0.0
    %v590 = vmax.f32 %v500, 0.0
    %v591 = vmax.f32 %v503, 0.0
    %v592 = vmax.f32 %v508, 0.0
    %v593 = vmax.f32 %v511, 0.0
    %v594 = vmax.f32 %v516, 0.0
    %v595 = vmax.f32 %v519, 0.0
    %v596 = vmax.f32 %v524, 0.0
    %v597 = vmax.f32 %v527, 0.0
    %v598 = vmax.f32 %v532, 0.0
    %v599 = vmax.f32 %v535, 0.0
    %v600 = vmax.f32 %v540, 0.0
    %v601 = vmax.f32 %v543, 0.0
    %v602 = vmax.f32 %v548, 0.0
    %v603 = vmax.f32 %v551, 0.0
    %v604 = vmax.f32 %v556, 0.0
    %v605 = vmax.f32 %v559, 0.0
    %v606 = vmax.f32 %v564, 0.0
    %v607 = vmax.f32 %v567, 0.0
    %v608 = vmax.f32 %v572, 0.0
    %v609 = vmax.f32 %v575, 0.0
    %v610 = vpack.c.bf16 %v579, %v578
    %v611 = vpack.c.bf16 %v581, %v580
    %v612 = vpack.c.bf16 %v583, %v582
    %v613 = vpack.c.bf16 %v585, %v584
    %v614 = vpack.c.bf16 %v587, %v586
    %v615 = vpack.c.bf16 %v589, %v588
    %v616 = vpack.c.bf16 %v591, %v590
    %v617 = vpack.c.bf16 %v593, %v592
    %v618 = vpack.c.bf16 %v595, %v594
    %v619 = vpack.c.bf16 %v597, %v596
    %v620 = vpack.c.bf16 %v599, %v598
    %v621 = vpack.c.bf16 %v601, %v600
    %v622 = vpack.c.bf16 %v603, %v602
    %v623 = vpack.c.bf16 %v605, %v604
    %v624 = vpack.c.bf16 %v607, %v606
    %v625 = vpack.c.bf16 %v609, %v608
    %v626 = vld [vmem:[%s5] sm:$0xf]
    %v627 = vld [vmem:[%s5 + $0x4] sm:$0xf]
    %v628 = vld [vmem:[%s5 + $0x8] sm:$0xf]
    %v629 = vld [vmem:[%s5 + $0xc] sm:$0xf]
    %v630 = vld [vmem:[%s5 + $0x10] sm:$0xf]
    %v631 = vld [vmem:[%s5 + $0x14] sm:$0xf]
    %v632 = vld [vmem:[%s5 + $0x18] sm:$0xf]
    %v633 = vld [vmem:[%s5 + $0x1c] sm:$0xf]
    %v634 = vld [vmem:[%s5 + $0x20] sm:$0xf]
    %v635 = vld [vmem:[%s5 + $0x24] sm:$0xf]
    %v636 = vld [vmem:[%s5 + $0x28] sm:$0xf]
    %v637 = vld [vmem:[%s5 + $0x2c] sm:$0xf]
    %v638 = vld [vmem:[%s5 + $0x30] sm:$0xf]
    %v639 = vld [vmem:[%s5 + $0x34] sm:$0xf]
    %v640 = vld [vmem:[%s5 + $0x38] sm:$0xf]
    %v641 = vld [vmem:[%s5 + $0x3c] sm:$0xf]
    %v642 = vld [vmem:[%s6] sm:$0x1]
    %v644 = vlaneseq
    %v645 = vshrl.u32 %v644, 7
    %v646 = vsub.s32 0, %v645
    %v647 = vrot.slane %v642, %v646
    %v665 = vunpack.c.l.b16 %v626
    %v666 = vunpack.c.l.b16 %v627
    %v667 = vunpack.c.l.b16 %v628
    %v668 = vunpack.c.l.b16 %v629
    %v669 = vunpack.c.l.b16 %v630
    %v670 = vunpack.c.l.b16 %v631
    %v671 = vunpack.c.l.b16 %v632
    %v672 = vunpack.c.l.b16 %v633
    %v673 = vunpack.c.l.b16 %v634
    %v674 = vunpack.c.l.b16 %v635
    %v675 = vunpack.c.l.b16 %v636
    %v676 = vunpack.c.l.b16 %v637
    %v677 = vunpack.c.l.b16 %v638
    %v678 = vunpack.c.l.b16 %v639
    %v679 = vunpack.c.l.b16 %v640
    %v680 = vunpack.c.l.b16 %v641
    %v681 = vpack.c.b16 %v666, %v665
    %v682 = vpack.c.b16 %v668, %v667
    %v683 = vpack.c.b16 %v670, %v669
    %v684 = vpack.c.b16 %v672, %v671
    %v685 = vpack.c.b16 %v674, %v673
    %v686 = vpack.c.b16 %v676, %v675
    %v687 = vpack.c.b16 %v678, %v677
    %v688 = vpack.c.b16 %v680, %v679
    %697 = vmatprep.subr.bf16.mxu0 0
    %698 = vmatpush1.bf16.msra.mxu0 %v681
    %699 = vmatprep.subr.bf16.mxu0 0
    %700 = vmatpush1.bf16.msra.mxu0 %v682
    %701 = vmatprep.subr.bf16.mxu0 0
    %702 = vmatpush1.bf16.msra.mxu0 %v683
    %703 = vmatprep.subr.bf16.mxu0 0
    %704 = vmatpush1.bf16.msra.mxu0 %v684
    %705 = vmatprep.subr.bf16.mxu0 0
    %706 = vmatpush1.bf16.msra.mxu0 %v685
    %707 = vmatprep.subr.bf16.mxu0 0
    %708 = vmatpush1.bf16.msra.mxu0 %v686
    %709 = vmatprep.subr.bf16.mxu0 0
    %710 = vmatpush1.bf16.msra.mxu0 %v687
    %711 = vmatprep.subr.bf16.mxu0 0
    %712 = vmatpush1.bf16.msra.mxu0 %v688
    %713 = vmatprep.subr.bf16.mxu0 0
    %714 = vmatpush1.bf16.msra.mxu0 0
    %715 = vmatprep.subr.bf16.mxu0 0
    %716 = vmatpush1.bf16.msra.mxu0 0
    %717 = vmatprep.subr.bf16.mxu0 0
    %718 = vmatpush1.bf16.msra.mxu0 0
    %719 = vmatprep.subr.bf16.mxu0 0
    %720 = vmatpush1.bf16.msra.mxu0 0
    %721 = vmatprep.subr.bf16.mxu0 0
    %722 = vmatpush1.bf16.msra.mxu0 0
    %723 = vmatprep.subr.bf16.mxu0 0
    %724 = vmatpush1.bf16.msra.mxu0 0
    %725 = vmatprep.subr.bf16.mxu0 0
    %726 = vmatpush1.bf16.msra.mxu0 0
    %727 = vmatprep.subr.bf16.mxu0 0
    %728 = vmatpush1.bf16.msra.mxu0 0
    %729 = vmatprep.mubr.bf16.mxu0 0
    %730 = vmatmul.mubr.bf16.gmra.mrb[0].mxu0 %v610
    %v731 = vpop.f32.mrb[0].mxu0
    %v732 = vadd.f32 %v647, %v731
    %v733 = vpop.f32.mrb[0].mxu0
    %v734 = vpop.f32.mrb[0].mxu0
    %v735 = vadd.f32 %v647, %v734
    %v736 = vpop.f32.mrb[0].mxu0
    %737 = vmatprep.mubr.bf16.mxu0 0
    %738 = vmatmul.mubr.bf16.gmra.mrb[0].mxu0 %v611
    %v739 = vpop.f32.mrb[0].mxu0
    %v740 = vadd.f32 %v647, %v739
    %v741 = vpop.f32.mrb[0].mxu0
    %v742 = vpop.f32.mrb[0].mxu0
    %v743 = vadd.f32 %v647, %v742
    %v744 = vpop.f32.mrb[0].mxu0
    %745 = vmatprep.mubr.bf16.mxu0 0
    %746 = vmatmul.mubr.bf16.gmra.mrb[0].mxu0 %v612
    %v747 = vpop.f32.mrb[0].mxu0
    %v748 = vadd.f32 %v647, %v747
    %v749 = vpop.f32.mrb[0].mxu0
    %v750 = vpop.f32.mrb[0].mxu0
    %v751 = vadd.f32 %v647, %v750
    %v752 = vpop.f32.mrb[0].mxu0
    %753 = vmatprep.mubr.bf16.mxu0 0
    %754 = vmatmul.mubr.bf16.gmra.mrb[0].mxu0 %v613
    %v755 = vpop.f32.mrb[0].mxu0
    %v756 = vadd.f32 %v647, %v755
    %v757 = vpop.f32.mrb[0].mxu0
    %v758 = vpop.f32.mrb[0].mxu0
    %v759 = vadd.f32 %v647, %v758
    %v760 = vpop.f32.mrb[0].mxu0
    %761 = vmatprep.mubr.bf16.mxu0 0
    %762 = vmatmul.mubr.bf16.gmra.mrb[0].mxu0 %v614
    %v763 = vpop.f32.mrb[0].mxu0
    %v764 = vadd.f32 %v647, %v763
    %v765 = vpop.f32.mrb[0].mxu0
    %v766 = vpop.f32.mrb[0].mxu0
    %v767 = vadd.f32 %v647, %v766
    %v768 = vpop.f32.mrb[0].mxu0
    %769 = vmatprep.mubr.bf16.mxu0 0
    %770 = vmatmul.mubr.bf16.gmra.mrb[0].mxu0 %v615
    %v771 = vpop.f32.mrb[0].mxu0
    %v772 = vadd.f32 %v647, %v771
    %v773 = vpop.f32.mrb[0].mxu0
    %v774 = vpop.f32.mrb[0].mxu0
    %v775 = vadd.f32 %v647, %v774
    %v776 = vpop.f32.mrb[0].mxu0
    %777 = vmatprep.mubr.bf16.mxu0 0
    %778 = vmatmul.mubr.bf16.gmra.mrb[0].mxu0 %v616
    %v779 = vpop.f32.mrb[0].mxu0
    %v780 = vadd.f32 %v647, %v779
    %v781 = vpop.f32.mrb[0].mxu0
    %v782 = vpop.f32.mrb[0].mxu0
    %v783 = vadd.f32 %v647, %v782
    %v784 = vpop.f32.mrb[0].mxu0
    %785 = vmatprep.mubr.bf16.mxu0 0
    %786 = vmatmul.mubr.bf16.gmra.mrb[0].mxu0 %v617
    %v787 = vpop.f32.mrb[0].mxu0
    %v788 = vadd.f32 %v647, %v787
    %v789 = vpop.f32.mrb[0].mxu0
    %v790 = vpop.f32.mrb[0].mxu0
    %v791 = vadd.f32 %v647, %v790
    %v792 = vpop.f32.mrb[0].mxu0
    %793 = vmatprep.mubr.bf16.mxu0 0
    %794 = vmatmul.mubr.bf16.gmra.mrb[0].mxu0 %v618
    %v795 = vpop.f32.mrb[0].mxu0
    %v796 = vadd.f32 %v647, %v795
    %v797 = vpop.f32.mrb[0].mxu0
    %v798 = vpop.f32.mrb[0].mxu0
    %v799 = vadd.f32 %v647, %v798
    %v800 = vpop.f32.mrb[0].mxu0
    %801 = vmatprep.mubr.bf16.mxu0 0
    %802 = vmatmul.mubr.bf16.gmra.mrb[0].mxu0 %v619
    %v803 = vpop.f32.mrb[0].mxu0
    %v804 = vadd.f32 %v647, %v803
    %v805 = vpop.f32.mrb[0].mxu0
    %v806 = vpop.f32.mrb[0].mxu0
    %v807 = vadd.f32 %v647, %v806
    %v808 = vpop.f32.mrb[0].mxu0
    %809 = vmatprep.mubr.bf16.mxu0 0
    %810 = vmatmul.mubr.bf16.gmra.mrb[0].mxu0 %v620
    %v811 = vpop.f32.mrb[0].mxu0
    %v812 = vadd.f32 %v647, %v811
    %v813 = vpop.f32.mrb[0].mxu0
    %v814 = vpop.f32.mrb[0].mxu0
    %v815 = vadd.f32 %v647, %v814
    %v816 = vpop.f32.mrb[0].mxu0
    %817 = vmatprep.mubr.bf16.mxu0 0
    %818 = vmatmul.mubr.bf16.gmra.mrb[0].mxu0 %v621
    %v819 = vpop.f32.mrb[0].mxu0
    %v820 = vadd.f32 %v647, %v819
    %v821 = vpop.f32.mrb[0].mxu0
    %v822 = vpop.f32.mrb[0].mxu0
    %v823 = vadd.f32 %v647, %v822
    %v824 = vpop.f32.mrb[0].mxu0
    %825 = vmatprep.mubr.bf16.mxu0 0
    %826 = vmatmul.mubr.bf16.gmra.mrb[0].mxu0 %v622
    %v827 = vpop.f32.mrb[0].mxu0
    %v828 = vadd.f32 %v647, %v827
    %v829 = vpop.f32.mrb[0].mxu0
    %v830 = vpop.f32.mrb[0].mxu0
    %v831 = vadd.f32 %v647, %v830
    %v832 = vpop.f32.mrb[0].mxu0
    %833 = vmatprep.mubr.bf16.mxu0 0
    %834 = vmatmul.mubr.bf16.gmra.mrb[0].mxu0 %v623
    %v835 = vpop.f32.mrb[0].mxu0
    %v836 = vadd.f32 %v647, %v835
    %v837 = vpop.f32.mrb[0].mxu0
    %v838 = vpop.f32.mrb[0].mxu0
    %v839 = vadd.f32 %v647, %v838
    %v840 = vpop.f32.mrb[0].mxu0
    %841 = vmatprep.mubr.bf16.mxu0 0
    %842 = vmatmul.mubr.bf16.gmra.mrb[0].mxu0 %v624
    %v843 = vpop.f32.mrb[0].mxu0
    %v844 = vadd.f32 %v647, %v843
    %v845 = vpop.f32.mrb[0].mxu0
    %v846 = vpop.f32.mrb[0].mxu0
    %v847 = vadd.f32 %v647, %v846
    %v848 = vpop.f32.mrb[0].mxu0
    %849 = vmatprep.mubr.bf16.mxu0 0
    %850 = vmatmul.mubr.bf16.gmra.mrb[0].mxu0 %v625
    %v851 = vpop.f32.mrb[0].mxu0
    %v852 = vadd.f32 %v647, %v851
    %v853 = vpop.f32.mrb[0].mxu0
    %v854 = vpop.f32.mrb[0].mxu0
    %v855 = vadd.f32 %v647, %v854
    %v856 = vpop.f32.mrb[0].mxu0
    %857 = vdwg.mxu0
    %v858 = vpack.c.bf16 %v735, %v732
    %v859 = vpack.c.bf16 %v743, %v740
    %v860 = vpack.c.bf16 %v751, %v748
    %v861 = vpack.c.bf16 %v759, %v756
    %v862 = vpack.c.bf16 %v767, %v764
    %v863 = vpack.c.bf16 %v775, %v772
    %v864 = vpack.c.bf16 %v783, %v780
    %v865 = vpack.c.bf16 %v791, %v788
    %v866 = vpack.c.bf16 %v799, %v796
    %v867 = vpack.c.bf16 %v807, %v804
    %v868 = vpack.c.bf16 %v815, %v812
    %v869 = vpack.c.bf16 %v823, %v820
    %v870 = vpack.c.bf16 %v831, %v828
    %v871 = vpack.c.bf16 %v839, %v836
    %v872 = vpack.c.bf16 %v847, %v844
    %v873 = vpack.c.bf16 %v855, %v852
    %v890 = vunpack.c.l.b16 %v858
    %v891 = vunpack.c.h.b16 %v858
    %v892 = vunpack.c.l.b16 %v859
    %v893 = vunpack.c.h.b16 %v859
    %v894 = vunpack.c.l.b16 %v860
    %v895 = vunpack.c.h.b16 %v860
    %v896 = vunpack.c.l.b16 %v861
    %v897 = vunpack.c.h.b16 %v861
    %v898 = vunpack.c.l.b16 %v862
    %v899 = vunpack.c.h.b16 %v862
    %v900 = vunpack.c.l.b16 %v863
    %v901 = vunpack.c.h.b16 %v863
    %v902 = vunpack.c.l.b16 %v864
    %v903 = vunpack.c.h.b16 %v864
    %v904 = vunpack.c.l.b16 %v865
    %v905 = vunpack.c.h.b16 %v865
    %v906 = vunpack.c.l.b16 %v866
    %v907 = vunpack.c.h.b16 %v866
    %v908 = vunpack.c.l.b16 %v867
    %v909 = vunpack.c.h.b16 %v867
    %v910 = vunpack.c.l.b16 %v868
    %v911 = vunpack.c.h.b16 %v868
    %v912 = vunpack.c.l.b16 %v869
    %v913 = vunpack.c.h.b16 %v869
    %v914 = vunpack.c.l.b16 %v870
    %v915 = vunpack.c.h.b16 %v870
    %v916 = vunpack.c.l.b16 %v871
    %v917 = vunpack.c.h.b16 %v871
    %v918 = vunpack.c.l.b16 %v872
    %v919 = vunpack.c.h.b16 %v872
    %v920 = vunpack.c.l.b16 %v873
    %v921 = vunpack.c.h.b16 %v873
    %v922 = vpack.c.b16 %v890, %v890
    %v923 = vpack.c.b16 %v891, %v891
    %v924 = vpack.c.b16 %v892, %v892
    %v925 = vpack.c.b16 %v893, %v893
    %v926 = vpack.c.b16 %v894, %v894
    %v927 = vpack.c.b16 %v895, %v895
    %v928 = vpack.c.b16 %v896, %v896
    %v929 = vpack.c.b16 %v897, %v897
    %v930 = vpack.c.b16 %v898, %v898
    %v931 = vpack.c.b16 %v899, %v899
    %v932 = vpack.c.b16 %v900, %v900
    %v933 = vpack.c.b16 %v901, %v901
    %v934 = vpack.c.b16 %v902, %v902
    %v935 = vpack.c.b16 %v903, %v903
    %v936 = vpack.c.b16 %v904, %v904
    %v937 = vpack.c.b16 %v905, %v905
    %v938 = vpack.c.b16 %v906, %v906
    %v939 = vpack.c.b16 %v907, %v907
    %v940 = vpack.c.b16 %v908, %v908
    %v941 = vpack.c.b16 %v909, %v909
    %v942 = vpack.c.b16 %v910, %v910
    %v943 = vpack.c.b16 %v911, %v911
    %v944 = vpack.c.b16 %v912, %v912
    %v945 = vpack.c.b16 %v913, %v913
    %v946 = vpack.c.b16 %v914, %v914
    %v947 = vpack.c.b16 %v915, %v915
    %v948 = vpack.c.b16 %v916, %v916
    %v949 = vpack.c.b16 %v917, %v917
    %v950 = vpack.c.b16 %v918, %v918
    %v951 = vpack.c.b16 %v919, %v919
    %v952 = vpack.c.b16 %v920, %v920
    %v953 = vpack.c.b16 %v921, %v921
    %986 = vst [vmem:[#allocation2] sm:$0xf] %v922
    %987 = vst [vmem:[#allocation2 + $0x4] sm:$0xf] %v923
    %988 = vst [vmem:[#allocation2 + $0x8] sm:$0xf] %v924
    %989 = vst [vmem:[#allocation2 + $0xc] sm:$0xf] %v925
    %990 = vst [vmem:[#allocation2 + $0x10] sm:$0xf] %v926
    %991 = vst [vmem:[#allocation2 + $0x14] sm:$0xf] %v927
    %992 = vst [vmem:[#allocation2 + $0x18] sm:$0xf] %v928
    %993 = vst [vmem:[#allocation2 + $0x1c] sm:$0xf] %v929
    %994 = vst [vmem:[#allocation2 + $0x20] sm:$0xf] %v930
    %995 = vst [vmem:[#allocation2 + $0x24] sm:$0xf] %v931
    %996 = vst [vmem:[#allocation2 + $0x28] sm:$0xf] %v932
    %997 = vst [vmem:[#allocation2 + $0x2c] sm:$0xf] %v933
    %998 = vst [vmem:[#allocation2 + $0x30] sm:$0xf] %v934
    %999 = vst [vmem:[#allocation2 + $0x34] sm:$0xf] %v935
    %1000 = vst [vmem:[#allocation2 + $0x38] sm:$0xf] %v936
    %1001 = vst [vmem:[#allocation2 + $0x3c] sm:$0xf] %v937
    %1002 = vst [vmem:[#allocation2 + $0x40] sm:$0xf] %v938
    %1003 = vst [vmem:[#allocation2 + $0x44] sm:$0xf] %v939
    %1004 = vst [vmem:[#allocation2 + $0x48] sm:$0xf] %v940
    %1005 = vst [vmem:[#allocation2 + $0x4c] sm:$0xf] %v941
    %1006 = vst [vmem:[#allocation2 + $0x50] sm:$0xf] %v942
    %1007 = vst [vmem:[#allocation2 + $0x54] sm:$0xf] %v943
    %1008 = vst [vmem:[#allocation2 + $0x58] sm:$0xf] %v944
    %1009 = vst [vmem:[#allocation2 + $0x5c] sm:$0xf] %v945
    %1010 = vst [vmem:[#allocation2 + $0x60] sm:$0xf] %v946
    %1011 = vst [vmem:[#allocation2 + $0x64] sm:$0xf] %v947
    %1012 = vst [vmem:[#allocation2 + $0x68] sm:$0xf] %v948
    %1013 = vst [vmem:[#allocation2 + $0x6c] sm:$0xf] %v949
    %1014 = vst [vmem:[#allocation2 + $0x70] sm:$0xf] %v950
    %1015 = vst [vmem:[#allocation2 + $0x74] sm:$0xf] %v951
    %1016 = vst [vmem:[#allocation2 + $0x78] sm:$0xf] %v952
    %1017 = vst [vmem:[#allocation2 + $0x7c] sm:$0xf] %v953
    // Predicated region
    $region30: #{tpu_custom_call.1} parent=1 // pred_check
      _
    $region31: #{tpu_custom_call.1} parent=1 // pred_check_branch
      %1019 = sbr.rel (0) target = $region33
    $region32: #{tpu_custom_call.1} parent=1 // pred_region
      %s1021 = ssub.s32 2048, 2048
      %1022 = vsyncadd [#allocation3], %s1021
      %s1023 = sshll.u32 [#allocation2], 4
      %s1024 = int_to_ptr.vmem [resolvable:$true] %s1023
      %1029 = dma.vmem_to_hbm [thread:$0]  %s1024, 2048, %s7, [#allocation3], 64, 64, 4
    $region33: #{tpu_custom_call.1} parent=1 // pred_fallthru
      _
    // Predicated region
    $region34: #{tpu_custom_call.1} parent=1 // pred_check
      _
    $region35: #{tpu_custom_call.1} parent=1 // pred_check_branch
      %1031 = sbr.rel (0) target = $region37
    $region36: #{tpu_custom_call.1} parent=1 // pred_region
      %1032 = dma.done [#allocation3], 2048
    $region37: #{tpu_custom_call.1} parent=1 // pred_fallthru
      _
    %1033 = vsyncpa [#allocation3], 1

</llo_original>
